<compile_context>
chip_gen: v7x
topology: tpu7x:2x2x1
jax: 0.10.0
libtpu: 0.0.40
codegen_flags: <defaults>
</compile_context>

<pallas_src>
import jax
import jax.numpy as jnp
from jax.experimental import pallas as pl
from jax.experimental.pallas import tpu as pltpu


def _head_kernel(x_ref, w_ref, b_ref, o_ref):
    """y = (x / max(||x||_2, eps)) @ W_t + b, row scale applied post-matmul (commutes)."""
    x = x_ref[...].astype(jnp.float32)                        # [TB, F], f32 for normalization
    # F.normalize(x, dim=-1): x / max(||x||_2, 1e-12)
    ss = jnp.sum(x * x, axis=-1, keepdims=True)               # [TB, 1]  (VPU mul + XLU reduce)
    inv = jax.lax.rsqrt(jnp.maximum(ss, 1e-24))               # EUP; == 1/max(||x||, 1e-12)
    # MXU matmul in the weight's (bf16) dtype with f32 accumulation; clean [F, C_pad] operand.
    y = jax.lax.dot_general(
        x.astype(w_ref.dtype), w_ref[...],
        dimension_numbers=(((1,), (0,)), ((), ())),
        preferred_element_type=jnp.float32)                   # [TB, C_pad]
    o_ref[...] = (y * inv + b_ref[...]).astype(o_ref.dtype)   # scale commutes with the dot


def _round_up(v, m):
    return ((v + m - 1) // m) * m


def prepare_head_params(weight, bias, mxu_dtype=jnp.bfloat16):
    """One-time (load-time) layout plumbing for the fc head.

    weight: [C, F] (PyTorch layout), bias: [C]  ->  (w_t [F, C_pad] mxu_dtype,
                                                     b_pad [1, C_pad] f32, C)
    """
    C, _F = weight.shape
    C_pad = _round_up(max(C, 1), 128)                          # lane-dense output stores
    w_t = jnp.pad(weight.T.astype(jnp.float32),
                  ((0, 0), (0, C_pad - C))).astype(mxu_dtype)  # [F, C_pad]
    b_pad = jnp.pad(bias.astype(jnp.float32),
                    (0, C_pad - C)).reshape(1, C_pad)          # [1, C_pad], stays f32
    return w_t, b_pad, C


def openclip_linear_head(features, w_t, b_pad, num_classes):
    """features: [B, F]; w_t: [F, C_pad]; b_pad: [1, C_pad]  ->  [B, num_classes] f32."""
    B, F = features.shape
    C_pad = w_t.shape[1]

    if B <= 16:
        # Tiny batch: single block equal to the full array (no (8,128) constraint, grid=1).
        TB = B
    else:
        # >= 2 tiles so both v7x TensorCores get work; cap at 512 rows (sweet spot for
        # the ~0.35us per-grid-step overhead vs DMA time); keep a sublane multiple.
        TB = min(512, _round_up(pl.cdiv(B, 2), 8))

    grid = (pl.cdiv(B, TB),)   # ragged last tile handled by Pallas masking; no batch pad

    out = pl.pallas_call(
        _head_kernel,
        out_shape=jax.ShapeDtypeStruct((B, C_pad), jnp.float32),
        grid_spec=pltpu.PrefetchScalarGridSpec(
            num_scalar_prefetch=0,
            grid=grid,
            in_specs=[
                pl.BlockSpec((TB, F), lambda i: (i, 0)),      # batch tile, pipelined
                pl.BlockSpec((F, C_pad), lambda i: (0, 0)),   # weight resident across tiles
                pl.BlockSpec((1, C_pad), lambda i: (0, 0)),   # bias resident
            ],
            out_specs=pl.BlockSpec((TB, C_pad), lambda i: (i, 0)),
        ),
        compiler_params=pltpu.CompilerParams(
            dimension_semantics=("parallel",)),   # shard batch tiles across v7x's 2 TCs
    )(features, w_t, b_pad)

    return out[:, :num_classes]


def openclip_linear_head_xla(features, weight, bias):
    """Plain-XLA fallback for very small batches (launch/padding overhead dominates)."""
    feats = features / jnp.maximum(
        jnp.linalg.norm(features, axis=-1, keepdims=True), 1e-12)
    return feats @ weight.T + bias[None, :]


def encode_image_stub(x_nchw, proj):
    """Deterministic stand-in for the frozen CLIP backbone (plain JAX glue).

    x_nchw: [B, 3, H, W] -> global average pool over H,W -> [B, 3] -> proj to [B, F].
    (L2 normalization happens inside the Pallas kernel.)
    """
    pooled = jnp.mean(x_nchw, axis=(2, 3))       # [B, 3]
    return pooled @ proj                         # [B, F]


if __name__ == "__main__":
    key = jax.random.PRNGKey(0)
    k_img, k_proj, k_w, k_b = jax.random.split(key, 4)

    # Small shapes consistent with the module's forward:
    B, C_in, H, W = 2, 3, 16, 16          # image batch, NCHW
    num_features = 256                    # small stand-in for CLIP's 768-d features
    num_classes = 1                       # default num_classes=1

    # Deterministic inputs / parameters.
    x_img = jax.random.normal(k_img, (B, C_in, H, W), dtype=jnp.float32)
    proj = jax.random.normal(k_proj, (C_in, num_features), dtype=jnp.float32) * 0.1

    # fc = ChannelLinear(num_features, num_classes); weight ~ N(0, 0.02), bias zeros.
    fc_weight = jax.random.normal(k_w, (num_classes, num_features), dtype=jnp.float32) * 0.02
    fc_bias = jnp.zeros((num_classes,), dtype=jnp.float32)

    # Load-time head preparation (transpose / pad / bf16 cast hoisted off the hot path).
    w_t, b_pad, C = prepare_head_params(fc_weight, fc_bias)

    # forward_features (backbone stub; no-grad / eval semantics hold trivially)
    features = encode_image_stub(x_img, proj)            # [B, F]

    # forward_head via the Pallas kernel (normalize + linear). For production, dispatch
    # B <= ~16 to openclip_linear_head_xla instead; here we exercise the kernel directly.
    out = openclip_linear_head(features, w_t, b_pad, C)
    out = jax.block_until_ready(out)

    # Reference check in plain JAX (f32 module semantics; bf16 MXU operands give ~1e-3
    # relative error on the matmul, so use a correspondingly loose tolerance).
    feats_ref = features / jnp.maximum(
        jnp.linalg.norm(features, axis=-1, keepdims=True), 1e-12)
    ref = feats_ref @ fc_weight.T + fc_bias[None, :]
    assert out.shape == (B, num_classes)
    assert jnp.all(jnp.isfinite(out))
    assert jnp.allclose(out, ref, atol=5e-3, rtol=5e-2)

    print("KERNEL_OK")
</pallas_src>

<mosaic_0001>
module attributes {stable_mosaic.version = 11 : i64} {
  func.func @_head_kernel(%arg0: i32, %arg1: memref<2x256xf32, #tpu.memory_space<vmem>>, %arg2: memref<256x128xbf16, #tpu.memory_space<vmem>>, %arg3: memref<1x128xf32, #tpu.memory_space<vmem>>, %arg4: memref<2x128xf32, #tpu.memory_space<vmem>>) attributes {dimension_semantics = [#tpu.dimension_semantics<parallel>], iteration_bounds = array<i64: 1>, scalar_prefetch = 0 : i64, scratch_operands = 0 : i64, tpu.core_type = #tpu.core_type<tc>, window_params = [{transform_indices = @transform_0, window_bounds = array<i64: 2, 256>}, {pipeline_mode = #tpu.pipeline_mode<synchronous>, transform_indices = @transform_1, window_bounds = array<i64: 256, 128>}, {pipeline_mode = #tpu.pipeline_mode<synchronous>, transform_indices = @transform_2, window_bounds = array<i64: 1, 128>}, {transform_indices = @transform_3, window_bounds = array<i64: 2, 128>}]} {
    %c0 = arith.constant 0 : index
    %c0_0 = arith.constant 0 : index
    %0 = vector.load %arg1[%c0, %c0_0] : memref<2x256xf32, #tpu.memory_space<vmem>>, vector<2x256xf32>
    %1 = arith.mulf %0, %0 : vector<2x256xf32>
    %cst = arith.constant dense<0.000000e+00> : vector<2xf32>
    %2 = vector.multi_reduction <add>, %1, %cst [1] : vector<2x256xf32> to vector<2xf32>
    %3 = vector.shape_cast %2 : vector<2xf32> to vector<2x1xf32>
    %cst_1 = arith.constant 1.000000e-24 : f32
    %4 = vector.broadcast %cst_1 : f32 to vector<2x1xf32>
    %5 = arith.maximumf %3, %4 : vector<2x1xf32>
    %6 = math.rsqrt %5 : vector<2x1xf32>
    %7 = arith.truncf %0 : vector<2x256xf32> to vector<2x256xbf16>
    %c0_2 = arith.constant 0 : index
    %c0_3 = arith.constant 0 : index
    %8 = vector.load %arg2[%c0_2, %c0_3] : memref<256x128xbf16, #tpu.memory_space<vmem>>, vector<256x128xbf16>
    %cst_4 = arith.constant dense<0.000000e+00> : vector<2x128xf32>
    %9 = tpu.matmul %7, %8, %cst_4 {dimension_numbers = #tpu.dot_dimension_numbers<[1], [0], [0], [1], [0, 0, 1, 1], [], []>} : vector<2x256xbf16>, vector<256x128xbf16>, vector<2x128xf32> -> vector<2x128xf32>
    %10 = vector.broadcast %6 : vector<2x1xf32> to vector<2x128xf32>
    %11 = arith.mulf %9, %10 : vector<2x128xf32>
    %c0_5 = arith.constant 0 : index
    %c0_6 = arith.constant 0 : index
    %12 = vector.load %arg3[%c0_5, %c0_6] : memref<1x128xf32, #tpu.memory_space<vmem>>, vector<1x128xf32>
    %13 = vector.broadcast %12 : vector<1x128xf32> to vector<2x128xf32>
    %14 = arith.addf %11, %13 : vector<2x128xf32>
    %c0_7 = arith.constant 0 : index
    %c0_8 = arith.constant 0 : index
    %15 = vector.load %arg4[%c0_7, %c0_8] : memref<2x128xf32, #tpu.memory_space<vmem>>, vector<2x128xf32>
    tpu.vector_store %arg4[%c0_7, %c0_8], %14 {strides = array<i32>} : memref<2x128xf32, #tpu.memory_space<vmem>>, vector<2x128xf32>,
    return
  }
  func.func @transform_0(%arg0: i32) -> (i32, i32) {
    %c0_i32 = arith.constant 0 : i32
    %c0_i32_0 = arith.constant 0 : i32
    return %arg0, %c0_i32 : i32, i32
  }
  func.func @transform_1(%arg0: i32) -> (i32, i32) {
    %c0_i32 = arith.constant 0 : i32
    %c0_i32_0 = arith.constant 0 : i32
    %c0_i32_1 = arith.constant 0 : i32
    return %c0_i32, %c0_i32_0 : i32, i32
  }
  func.func @transform_2(%arg0: i32) -> (i32, i32) {
    %c0_i32 = arith.constant 0 : i32
    %c0_i32_0 = arith.constant 0 : i32
    %c0_i32_1 = arith.constant 0 : i32
    return %c0_i32, %c0_i32_0 : i32, i32
  }
  func.func @transform_3(%arg0: i32) -> (i32, i32) {
    %c0_i32 = arith.constant 0 : i32
    %c0_i32_0 = arith.constant 0 : i32
    return %arg0, %c0_i32 : i32, i32
  }
}

</mosaic_0001>

<llo_original>
// kernel: tpu_custom_call.1
$region0: #{tpu_custom_call.1}
  #allocation0 [shape = 'u32[]', space=smem, size = 0x4, offset = 0x4, fixed_abs, tag = 'smem constant byte address 0x4 - core index']
  #allocation1 [shape = 'u32[144,128]{1,0:T(1,128)}', space=vmem, size = 0x12000, scoped, tag = 'internal scratch']
  %s0 = inlined_call_operand.hbm [shape: f32[2,256], index: 0, kind: input, shape index: {}]
  %s1 = inlined_call_operand.hbm [shape: bf16[256,128], index: 1, kind: input, shape index: {}]
  %s2 = inlined_call_operand.vmem [shape: f32[1,128], index: 2, kind: input, shape index: {}]
  %s3 = inlined_call_operand.hbm [shape: f32[2,128], index: 3, kind: output, shape index: {}]
  %s4 = sld [smem:[#allocation0]]
  $region30: #{tpu_custom_call.1} parent=0
    _
  %s6 = ssub.s32 1, %s4
  %s7 = scalar_select 0, %s6, %s4
  $region1: #{tpu_custom_call.1} parent=0
    #allocation2 [shape = 'u8[2048]{0}', space=vmem, size = 0x800, scoped, tag = 'input window, operand 0, single buffered']
    #allocation3 [shape = 's32[1]{0}', space=sflag, size = 0x4, scoped, tag = 'scoped memory for tpu_custom_call.1']
    #allocation4 [shape = 's32[1]{0}', space=sflag, size = 0x4, scoped, tag = 'scoped memory for tpu_custom_call.1']
    #allocation5 [shape = 'u8[65536]{0}', space=vmem, size = 0x10000, scoped, tag = 'input window, operand 1, single buffered']
    #allocation6 [shape = 's32[1]{0}', space=sflag, size = 0x4, scoped, tag = 'scoped memory for tpu_custom_call.1']
    #allocation7 [shape = 'u8[1024]{0}', space=vmem, size = 0x400, scoped, tag = 'output window, operand 0, single buffered']
    %8 = vsyncpa [#allocation3], 0
    %9 = vsyncpa [#allocation6], 0
    %10 = vsyncpa [#allocation4], 0
    // Predicated region
    $region2: #{tpu_custom_call.1} parent=1 // pred_check
      _
    $region3: #{tpu_custom_call.1} parent=1 // pred_check_branch
      %12 = sbr.rel (0) target = $region5
    $region4: #{tpu_custom_call.1} parent=1 // pred_region
      %s14 = ssub.s32 64, 64
      %15 = vsyncadd [#allocation3], %s14
      %s17 = sshll.u32 [#allocation2], 4
      %s18 = int_to_ptr.vmem [resolvable:$true] %s17
      %20 = dma.hbm_to_vmem [thread:$0]  %s0, 64, %s18, [#allocation3]
    $region5: #{tpu_custom_call.1} parent=1 // pred_fallthru
      _
    // Predicated region
    $region6: #{tpu_custom_call.1} parent=1 // pred_check
      _
    $region7: #{tpu_custom_call.1} parent=1 // pred_check_branch
      %22 = sbr.rel (0) target = $region9
    $region8: #{tpu_custom_call.1} parent=1 // pred_region
      %s24 = ssub.s32 2048, 2048
      %25 = vsyncadd [#allocation6], %s24
      %s26 = sshll.u32 [#allocation5], 4
      %s27 = int_to_ptr.vmem [resolvable:$true] %s26
      %32 = dma.hbm_to_vmem [thread:$0]  %s1, 2048, %s27, [#allocation6], 64, 64, 4
    $region9: #{tpu_custom_call.1} parent=1 // pred_fallthru
      _
    // Predicated region
    $region10: #{tpu_custom_call.1} parent=1 // pred_check
      _
    $region11: #{tpu_custom_call.1} parent=1 // pred_check_branch
      %34 = sbr.rel (0) target = $region13
    $region12: #{tpu_custom_call.1} parent=1 // pred_region
      _
    $region13: #{tpu_custom_call.1} parent=1 // pred_fallthru
      _
    // Predicated region
    $region14: #{tpu_custom_call.1} parent=1 // pred_check
      _
    $region15: #{tpu_custom_call.1} parent=1 // pred_check_branch
      %36 = sbr.rel (0) target = $region17
    $region16: #{tpu_custom_call.1} parent=1 // pred_region
      %37 = dma.done [#allocation3], 64
    $region17: #{tpu_custom_call.1} parent=1 // pred_fallthru
      _
    // Predicated region
    $region18: #{tpu_custom_call.1} parent=1 // pred_check
      _
    $region19: #{tpu_custom_call.1} parent=1 // pred_check_branch
      %39 = sbr.rel (0) target = $region21
    $region20: #{tpu_custom_call.1} parent=1 // pred_region
      %40 = dma.done [#allocation6], 2048
    $region21: #{tpu_custom_call.1} parent=1 // pred_fallthru
      _
    %v42 = vld [vmem:[#allocation2] sm:$0xf]
    %v43 = vmul.f32 %v42, %v42
    %v46 = vunpack.c.l.s4 1983009808
    %v47 = vunpack.c.0.s8 %v46
    %v48 = vlaneseq
    %v49 = vshrl.u32 %v48, 7
    %v50 = vsub.s32 %v47, %v49
    %v51 = vrot.slane %v43, %v50
    %v52 = vcombine.high %v51, %v51
    %vm55 = vcmask 1041408
    %v56 = vsel %vm55, %v51, 0.0
    %v57 = vsel %vm55, %v52, 0.0
    %v58 = vadd.f32 %v56, %v57
    %59 = vadd.xlane.f32.xlu0 %v58
    %v60 = vpop.xlane.xlu0 %59
    %v61 = vmax.f32 %v60, 1e-24
    %v62 = vrsqrt.pop %v61
    %v65 = vunpack.c.l.s4 1983009808
    %v66 = vunpack.c.0.s8 %v65
    %v67 = vlaneseq
    %v68 = vshrl.u32 %v67, 7
    %v69 = vsub.s32 %v66, %v68
    %v70 = vrot.slane %v42, %v69
    %v71 = vcombine.high %v70, %v70
    %v74 = vpack.c.bf16 %v70, %v70
    %v75 = vpack.c.bf16 %v71, %v71
    %v76 = vld [vmem:[#allocation5] sm:$0xf]
    %v77 = vld [vmem:[#allocation5 + $0x4] sm:$0xf]
    %v78 = vld [vmem:[#allocation5 + $0x8] sm:$0xf]
    %v79 = vld [vmem:[#allocation5 + $0xc] sm:$0xf]
    %v80 = vld [vmem:[#allocation5 + $0x10] sm:$0xf]
    %v81 = vld [vmem:[#allocation5 + $0x14] sm:$0xf]
    %v82 = vld [vmem:[#allocation5 + $0x18] sm:$0xf]
    %v83 = vld [vmem:[#allocation5 + $0x1c] sm:$0xf]
    %v84 = vld [vmem:[#allocation5 + $0x20] sm:$0xf]
    %v85 = vld [vmem:[#allocation5 + $0x24] sm:$0xf]
    %v86 = vld [vmem:[#allocation5 + $0x28] sm:$0xf]
    %v87 = vld [vmem:[#allocation5 + $0x2c] sm:$0xf]
    %v88 = vld [vmem:[#allocation5 + $0x30] sm:$0xf]
    %v89 = vld [vmem:[#allocation5 + $0x34] sm:$0xf]
    %v90 = vld [vmem:[#allocation5 + $0x38] sm:$0xf]
    %v91 = vld [vmem:[#allocation5 + $0x3c] sm:$0xf]
    %v92 = vld [vmem:[#allocation5 + $0x40] sm:$0xf]
    %v93 = vld [vmem:[#allocation5 + $0x44] sm:$0xf]
    %v94 = vld [vmem:[#allocation5 + $0x48] sm:$0xf]
    %v95 = vld [vmem:[#allocation5 + $0x4c] sm:$0xf]
    %v96 = vld [vmem:[#allocation5 + $0x50] sm:$0xf]
    %v97 = vld [vmem:[#allocation5 + $0x54] sm:$0xf]
    %v98 = vld [vmem:[#allocation5 + $0x58] sm:$0xf]
    %v99 = vld [vmem:[#allocation5 + $0x5c] sm:$0xf]
    %v100 = vld [vmem:[#allocation5 + $0x60] sm:$0xf]
    %v101 = vld [vmem:[#allocation5 + $0x64] sm:$0xf]
    %v102 = vld [vmem:[#allocation5 + $0x68] sm:$0xf]
    %v103 = vld [vmem:[#allocation5 + $0x6c] sm:$0xf]
    %v104 = vld [vmem:[#allocation5 + $0x70] sm:$0xf]
    %v105 = vld [vmem:[#allocation5 + $0x74] sm:$0xf]
    %v106 = vld [vmem:[#allocation5 + $0x78] sm:$0xf]
    %v107 = vld [vmem:[#allocation5 + $0x7c] sm:$0xf]
    %v140 = vunpack.c.l.b16 %v76
    %v141 = vunpack.c.l.b16 %v77
    %v142 = vunpack.c.l.b16 %v78
    %v143 = vunpack.c.l.b16 %v79
    %v144 = vunpack.c.l.b16 %v80
    %v145 = vunpack.c.l.b16 %v81
    %v146 = vunpack.c.l.b16 %v82
    %v147 = vunpack.c.l.b16 %v83
    %v148 = vunpack.c.l.b16 %v84
    %v149 = vunpack.c.l.b16 %v85
    %v150 = vunpack.c.l.b16 %v86
    %v151 = vunpack.c.l.b16 %v87
    %v152 = vunpack.c.l.b16 %v88
    %v153 = vunpack.c.l.b16 %v89
    %v154 = vunpack.c.l.b16 %v90
    %v155 = vunpack.c.l.b16 %v91
    %v156 = vunpack.c.l.b16 %v92
    %v157 = vunpack.c.l.b16 %v93
    %v158 = vunpack.c.l.b16 %v94
    %v159 = vunpack.c.l.b16 %v95
    %v160 = vunpack.c.l.b16 %v96
    %v161 = vunpack.c.l.b16 %v97
    %v162 = vunpack.c.l.b16 %v98
    %v163 = vunpack.c.l.b16 %v99
    %v164 = vunpack.c.l.b16 %v100
    %v165 = vunpack.c.l.b16 %v101
    %v166 = vunpack.c.l.b16 %v102
    %v167 = vunpack.c.l.b16 %v103
    %v168 = vunpack.c.l.b16 %v104
    %v169 = vunpack.c.l.b16 %v105
    %v170 = vunpack.c.l.b16 %v106
    %v171 = vunpack.c.l.b16 %v107
    %v172 = vpack.c.b16 %v141, %v140
    %v173 = vpack.c.b16 %v143, %v142
    %v174 = vpack.c.b16 %v145, %v144
    %v175 = vpack.c.b16 %v147, %v146
    %v176 = vpack.c.b16 %v149, %v148
    %v177 = vpack.c.b16 %v151, %v150
    %v178 = vpack.c.b16 %v153, %v152
    %v179 = vpack.c.b16 %v155, %v154
    %v180 = vpack.c.b16 %v157, %v156
    %v181 = vpack.c.b16 %v159, %v158
    %v182 = vpack.c.b16 %v161, %v160
    %v183 = vpack.c.b16 %v163, %v162
    %v184 = vpack.c.b16 %v165, %v164
    %v185 = vpack.c.b16 %v167, %v166
    %v186 = vpack.c.b16 %v169, %v168
    %v187 = vpack.c.b16 %v171, %v170
    %204 = vmatprep.subr.bf16.mxu0 0
    %205 = vmatpush1.bf16.msra.mxu0 %v172
    %206 = vmatprep.subr.bf16.mxu0 0
    %207 = vmatpush1.bf16.msra.mxu0 %v173
    %208 = vmatprep.subr.bf16.mxu0 0
    %209 = vmatpush1.bf16.msra.mxu0 %v174
    %210 = vmatprep.subr.bf16.mxu0 0
    %211 = vmatpush1.bf16.msra.mxu0 %v175
    %212 = vmatprep.subr.bf16.mxu0 0
    %213 = vmatpush1.bf16.msra.mxu0 %v176
    %214 = vmatprep.subr.bf16.mxu0 0
    %215 = vmatpush1.bf16.msra.mxu0 %v177
    %216 = vmatprep.subr.bf16.mxu0 0
    %217 = vmatpush1.bf16.msra.mxu0 %v178
    %218 = vmatprep.subr.bf16.mxu0 0
    %219 = vmatpush1.bf16.msra.mxu0 %v179
    %220 = vmatprep.subr.bf16.mxu0 0
    %221 = vmatpush1.bf16.msra.mxu0 %v180
    %222 = vmatprep.subr.bf16.mxu0 0
    %223 = vmatpush1.bf16.msra.mxu0 %v181
    %224 = vmatprep.subr.bf16.mxu0 0
    %225 = vmatpush1.bf16.msra.mxu0 %v182
    %226 = vmatprep.subr.bf16.mxu0 0
    %227 = vmatpush1.bf16.msra.mxu0 %v183
    %228 = vmatprep.subr.bf16.mxu0 0
    %229 = vmatpush1.bf16.msra.mxu0 %v184
    %230 = vmatprep.subr.bf16.mxu0 0
    %231 = vmatpush1.bf16.msra.mxu0 %v185
    %232 = vmatprep.subr.bf16.mxu0 0
    %233 = vmatpush1.bf16.msra.mxu0 %v186
    %234 = vmatprep.subr.bf16.mxu0 0
    %235 = vmatpush1.bf16.msra.mxu0 %v187
    %236 = vmatprep.mubr.bf16.mxu0 %v75
    %237 = vmatmul.mubr.bf16.gmra.mrb[0].mxu0 %v74
    %v238 = vpop.f32.mrb[0].mxu0
    %v239 = vadd.f32 0.0, %v238
    %v240 = vpop.f32.mrb[0].mxu0
    %v241 = vpop.f32.mrb[0].mxu0
    %v242 = vpop.f32.mrb[0].mxu0
    %243 = vdwg.mxu0
    %v244 = vmul.f32 %v239, %v62
    %v245 = vld [vmem:[%s2] sm:$0x1]
    %v247 = vlaneseq
    %v248 = vshrl.u32 %v247, 7
    %v249 = vsub.s32 0, %v248
    %v250 = vrot.slane %v245, %v249
    %v252 = vadd.f32 %v244, %v250
    %253 = vst [vmem:[#allocation7] sm:$0x3] %v252
    // Predicated region
    $region22: #{tpu_custom_call.1} parent=1 // pred_check
      _
    $region23: #{tpu_custom_call.1} parent=1 // pred_check_branch
      %255 = sbr.rel (0) target = $region25
    $region24: #{tpu_custom_call.1} parent=1 // pred_region
      %s257 = ssub.s32 32, 32
      %258 = vsyncadd [#allocation4], %s257
      %s260 = sshll.u32 [#allocation7], 4
      %s261 = int_to_ptr.vmem [resolvable:$true] %s260
      %263 = dma.vmem_to_hbm [thread:$0]  %s261, 32, %s3, [#allocation4]
    $region25: #{tpu_custom_call.1} parent=1 // pred_fallthru
      _
    // Predicated region
    $region26: #{tpu_custom_call.1} parent=1 // pred_check
      _
    $region27: #{tpu_custom_call.1} parent=1 // pred_check_branch
      %265 = sbr.rel (0) target = $region29
    $region28: #{tpu_custom_call.1} parent=1 // pred_region
      %266 = dma.done [#allocation4], 32
    $region29: #{tpu_custom_call.1} parent=1 // pred_fallthru
      _
    %267 = vsyncpa [#allocation3], 1
    %268 = vsyncpa [#allocation6], 1
    %269 = vsyncpa [#allocation4], 1

</llo_original>
